<compile_context>
chip_gen: v7x
topology: tpu7x:2x2x1
jax: 0.10.0
libtpu: 0.0.40
codegen_flags: <defaults>
</compile_context>

<pallas_src>
import functools

import jax
import jax.numpy as jnp
from jax.experimental import pallas as pl
from jax.experimental.pallas import tpu as pltpu

IN_F = 16 * 4 * 4          # 256 (already a multiple of 128)
H1, H2, OUT = 120, 84, 10  # logical feature widths (torch module)
H1_P, H2_P, OUT_P = 128, 128, 128  # lane-padded widths fed to the kernel


def _round_up(n, m):
    return ((n + m - 1) // m) * m


def _mlp_kernel(x_ref, w1_ref, b1_ref, w2_ref, b2_ref, w3_ref, b3_ref, o_ref):
    # fc1 + ReLU  (bf16 x bf16 -> f32 accumulate on the MXU)
    h1 = jnp.dot(x_ref[...], w1_ref[...], preferred_element_type=jnp.float32)
    h1 = jnp.maximum(h1 + b1_ref[...], 0.0)
    # fc2 + ReLU
    h2 = jnp.dot(h1.astype(jnp.bfloat16), w2_ref[...],
                 preferred_element_type=jnp.float32)
    h2 = jnp.maximum(h2 + b2_ref[...], 0.0)
    # fc3 (no activation)
    h3 = jnp.dot(h2.astype(jnp.bfloat16), w3_ref[...],
                 preferred_element_type=jnp.float32)
    o_ref[...] = (h3 + b3_ref[...]).astype(o_ref.dtype)


def server_model_forward(x, padded_params, *, tile_b=512):
    """x: (B, 16, 4, 4) NCHW float32. Returns (B, 10) float32 logits."""
    w1, b1, w2, b2, w3, b3 = padded_params
    B = x.shape[0]
    # Row-major flatten == torch's x.view(-1, 16*4*4); cast streamed operand
    # to bf16 (accumulation stays f32 inside the kernel).
    x2d = x.reshape(B, IN_F).astype(jnp.bfloat16)

    # Batch tile: multiple of the bf16 sublane pack (16), capped at tile_b.
    # Sized comfortably under v7x's 64 MiB VMEM (x tile 512*256*2B = 256 KiB
    # double-buffered + resident weights ~130 KiB).
    tb = min(tile_b, _round_up(max(B, 1), 16))
    b_pad = _round_up(B, tb)
    if b_pad != B:
        x2d = jnp.pad(x2d, ((0, b_pad - B), (0, 0)))

    grid = (b_pad // tb,)

    def resident(shape):
        # Constant block index: DMA'd once, stays in VMEM across grid steps.
        return pl.BlockSpec(shape, lambda i: (0, 0))

    param_bytes = sum(int(p.size) * p.dtype.itemsize
                      for p in (w1, b1, w2, b2, w3, b3))
    cost = pl.CostEstimate(
        flops=int(2 * b_pad * (IN_F * H1_P + H1_P * H2_P + H2_P * OUT_P)),
        transcendentals=0,
        bytes_accessed=int(b_pad * IN_F * 2 + b_pad * OUT_P * 4 + param_bytes),
    )

    out = pl.pallas_call(
        _mlp_kernel,
        out_shape=jax.ShapeDtypeStruct((b_pad, OUT_P), jnp.float32),
        grid_spec=pltpu.PrefetchScalarGridSpec(
            num_scalar_prefetch=0,
            grid=grid,
            in_specs=[
                pl.BlockSpec((tb, IN_F), lambda i: (i, 0)),   # streamed x
                resident((IN_F, H1_P)), resident((1, H1_P)),
                resident((H1_P, H2_P)), resident((1, H2_P)),
                resident((H2_P, OUT_P)), resident((1, OUT_P)),
            ],
            out_specs=pl.BlockSpec((tb, OUT_P), lambda i: (i, 0)),
        ),
        compiler_params=pltpu.CompilerParams(
            dimension_semantics=("parallel",)),   # megacore split on v7x
        cost_estimate=cost,
    )(x2d, w1, b1, w2, b2, w3, b3)

    return out[:B, :OUT]


def init_params(key):
    """PyTorch nn.Linear default init: U(-1/sqrt(fan_in), 1/sqrt(fan_in))."""
    def linear(key, fan_in, fan_out):
        kw, kb = jax.random.split(key)
        bound = 1.0 / jnp.sqrt(jnp.float32(fan_in))
        # stored as (in, out) so the kernel does x @ W (== torch x @ W_t.T)
        w = jax.random.uniform(kw, (fan_in, fan_out), jnp.float32, -bound, bound)
        b = jax.random.uniform(kb, (1, fan_out), jnp.float32, -bound, bound)
        return w, b

    k1, k2, k3 = jax.random.split(key, 3)
    return linear(k1, IN_F, H1), linear(k2, H1, H2), linear(k3, H2, OUT)


def prepare_params(params):
    """Zero-pad feature dims to 128 multiples; weights -> bf16, biases -> f32."""
    (w1, b1), (w2, b2), (w3, b3) = params

    def pad_to(a, shape):
        return jnp.pad(a, [(0, t - s) for s, t in zip(a.shape, shape)])

    return (
        pad_to(w1, (IN_F, H1_P)).astype(jnp.bfloat16), pad_to(b1, (1, H1_P)),
        pad_to(w2, (H1_P, H2_P)).astype(jnp.bfloat16), pad_to(b2, (1, H2_P)),
        pad_to(w3, (H2_P, OUT_P)).astype(jnp.bfloat16), pad_to(b3, (1, OUT_P)),
    )


def _reference_forward_bf16(x, padded_params):
    """Plain-JAX reference mimicking the kernel's bf16/f32 numerics."""
    w1, b1, w2, b2, w3, b3 = padded_params
    h = x.reshape(x.shape[0], -1).astype(jnp.bfloat16)
    h = jnp.maximum(jnp.dot(h, w1, preferred_element_type=jnp.float32) + b1, 0.0)
    h = jnp.maximum(
        jnp.dot(h.astype(jnp.bfloat16), w2, preferred_element_type=jnp.float32)
        + b2, 0.0)
    h = jnp.dot(h.astype(jnp.bfloat16), w3,
                preferred_element_type=jnp.float32) + b3
    return h[:, :OUT]


def _reference_forward_f32(x, params):
    """Full-precision reference of the original torch module."""
    (w1, b1), (w2, b2), (w3, b3) = params
    h = x.reshape(x.shape[0], -1)
    h = jnp.maximum(h @ w1 + b1, 0.0)
    h = jnp.maximum(h @ w2 + b2, 0.0)
    return h @ w3 + b3


if __name__ == "__main__":
    key = jax.random.PRNGKey(0)
    kx, kp = jax.random.split(key)

    # Input consistent with forward's view(-1, 16*4*4): (B, 16, 4, 4) NCHW.
    x = jax.random.normal(kx, (2, 16, 4, 4), jnp.float32)
    params = init_params(kp)
    padded_params = prepare_params(params)

    fwd = jax.jit(functools.partial(server_model_forward, tile_b=512))
    out = jax.block_until_ready(fwd(x, padded_params))
    assert out.shape == (2, 10)

    # Matches a reference with identical bf16 quantization tightly ...
    ref_bf16 = _reference_forward_bf16(x, padded_params)
    assert jnp.allclose(out, ref_bf16, atol=2e-3, rtol=2e-3)
    # ... and the full-f32 torch semantics within bf16 tolerance.
    ref_f32 = _reference_forward_f32(x, params)
    assert jnp.allclose(out, ref_f32, atol=5e-2, rtol=5e-2)

    print("KERNEL_OK")
</pallas_src>

<mosaic_0001>
module attributes {stable_mosaic.version = 11 : i64} {
  func.func @_mlp_kernel(%arg0: i32, %arg1: memref<16x256xbf16, #tpu.memory_space<vmem>>, %arg2: memref<256x128xbf16, #tpu.memory_space<vmem>>, %arg3: memref<1x128xf32, #tpu.memory_space<vmem>>, %arg4: memref<128x128xbf16, #tpu.memory_space<vmem>>, %arg5: memref<1x128xf32, #tpu.memory_space<vmem>>, %arg6: memref<128x128xbf16, #tpu.memory_space<vmem>>, %arg7: memref<1x128xf32, #tpu.memory_space<vmem>>, %arg8: memref<16x128xf32, #tpu.memory_space<vmem>>) attributes {dimension_semantics = [#tpu.dimension_semantics<parallel>], iteration_bounds = array<i64: 1>, scalar_prefetch = 0 : i64, scratch_operands = 0 : i64, tpu.core_type = #tpu.core_type<tc>, window_params = [{transform_indices = @transform_0, window_bounds = array<i64: 16, 256>}, {pipeline_mode = #tpu.pipeline_mode<synchronous>, transform_indices = @transform_1, window_bounds = array<i64: 256, 128>}, {pipeline_mode = #tpu.pipeline_mode<synchronous>, transform_indices = @transform_2, window_bounds = array<i64: 1, 128>}, {pipeline_mode = #tpu.pipeline_mode<synchronous>, transform_indices = @transform_3, window_bounds = array<i64: 128, 128>}, {pipeline_mode = #tpu.pipeline_mode<synchronous>, transform_indices = @transform_4, window_bounds = array<i64: 1, 128>}, {pipeline_mode = #tpu.pipeline_mode<synchronous>, transform_indices = @transform_5, window_bounds = array<i64: 128, 128>}, {pipeline_mode = #tpu.pipeline_mode<synchronous>, transform_indices = @transform_6, window_bounds = array<i64: 1, 128>}, {transform_indices = @transform_7, window_bounds = array<i64: 16, 128>}]} {
    %c0 = arith.constant 0 : index
    %c0_0 = arith.constant 0 : index
    %0 = vector.load %arg1[%c0, %c0_0] : memref<16x256xbf16, #tpu.memory_space<vmem>>, vector<16x256xbf16>
    %c0_1 = arith.constant 0 : index
    %c0_2 = arith.constant 0 : index
    %1 = vector.load %arg2[%c0_1, %c0_2] : memref<256x128xbf16, #tpu.memory_space<vmem>>, vector<256x128xbf16>
    %cst = arith.constant dense<0.000000e+00> : vector<16x128xf32>
    %2 = tpu.matmul %0, %1, %cst {dimension_numbers = #tpu.dot_dimension_numbers<[1], [0], [0], [1], [0, 0, 1, 1], [], []>} : vector<16x256xbf16>, vector<256x128xbf16>, vector<16x128xf32> -> vector<16x128xf32>
    %c0_3 = arith.constant 0 : index
    %c0_4 = arith.constant 0 : index
    %3 = vector.load %arg3[%c0_3, %c0_4] : memref<1x128xf32, #tpu.memory_space<vmem>>, vector<1x128xf32>
    %4 = vector.broadcast %3 : vector<1x128xf32> to vector<16x128xf32>
    %5 = arith.addf %2, %4 : vector<16x128xf32>
    %cst_5 = arith.constant 0.000000e+00 : f32
    %6 = vector.broadcast %cst_5 : f32 to vector<16x128xf32>
    %7 = arith.maximumf %5, %6 : vector<16x128xf32>
    %8 = arith.truncf %7 : vector<16x128xf32> to vector<16x128xbf16>
    %c0_6 = arith.constant 0 : index
    %c0_7 = arith.constant 0 : index
    %9 = vector.load %arg4[%c0_6, %c0_7] : memref<128x128xbf16, #tpu.memory_space<vmem>>, vector<128x128xbf16>
    %cst_8 = arith.constant dense<0.000000e+00> : vector<16x128xf32>
    %10 = tpu.matmul %8, %9, %cst_8 {dimension_numbers = #tpu.dot_dimension_numbers<[1], [0], [0], [1], [0, 0, 1, 1], [], []>} : vector<16x128xbf16>, vector<128x128xbf16>, vector<16x128xf32> -> vector<16x128xf32>
    %c0_9 = arith.constant 0 : index
    %c0_10 = arith.constant 0 : index
    %11 = vector.load %arg5[%c0_9, %c0_10] : memref<1x128xf32, #tpu.memory_space<vmem>>, vector<1x128xf32>
    %12 = vector.broadcast %11 : vector<1x128xf32> to vector<16x128xf32>
    %13 = arith.addf %10, %12 : vector<16x128xf32>
    %cst_11 = arith.constant 0.000000e+00 : f32
    %14 = vector.broadcast %cst_11 : f32 to vector<16x128xf32>
    %15 = arith.maximumf %13, %14 : vector<16x128xf32>
    %16 = arith.truncf %15 : vector<16x128xf32> to vector<16x128xbf16>
    %c0_12 = arith.constant 0 : index
    %c0_13 = arith.constant 0 : index
    %17 = vector.load %arg6[%c0_12, %c0_13] : memref<128x128xbf16, #tpu.memory_space<vmem>>, vector<128x128xbf16>
    %cst_14 = arith.constant dense<0.000000e+00> : vector<16x128xf32>
    %18 = tpu.matmul %16, %17, %cst_14 {dimension_numbers = #tpu.dot_dimension_numbers<[1], [0], [0], [1], [0, 0, 1, 1], [], []>} : vector<16x128xbf16>, vector<128x128xbf16>, vector<16x128xf32> -> vector<16x128xf32>
    %c0_15 = arith.constant 0 : index
    %c0_16 = arith.constant 0 : index
    %19 = vector.load %arg7[%c0_15, %c0_16] : memref<1x128xf32, #tpu.memory_space<vmem>>, vector<1x128xf32>
    %20 = vector.broadcast %19 : vector<1x128xf32> to vector<16x128xf32>
    %21 = arith.addf %18, %20 : vector<16x128xf32>
    %c0_17 = arith.constant 0 : index
    %c0_18 = arith.constant 0 : index
    %22 = vector.load %arg8[%c0_17, %c0_18] : memref<16x128xf32, #tpu.memory_space<vmem>>, vector<16x128xf32>
    tpu.vector_store %arg8[%c0_17, %c0_18], %21 {strides = array<i32>} : memref<16x128xf32, #tpu.memory_space<vmem>>, vector<16x128xf32>,
    return
  }
  func.func @transform_0(%arg0: i32) -> (i32, i32) {
    %c0_i32 = arith.constant 0 : i32
    %c0_i32_0 = arith.constant 0 : i32
    return %arg0, %c0_i32 : i32, i32
  }
  func.func @transform_1(%arg0: i32) -> (i32, i32) {
    %c0_i32 = arith.constant 0 : i32
    %c0_i32_0 = arith.constant 0 : i32
    %c0_i32_1 = arith.constant 0 : i32
    return %c0_i32, %c0_i32_0 : i32, i32
  }
  func.func @transform_2(%arg0: i32) -> (i32, i32) {
    %c0_i32 = arith.constant 0 : i32
    %c0_i32_0 = arith.constant 0 : i32
    %c0_i32_1 = arith.constant 0 : i32
    return %c0_i32, %c0_i32_0 : i32, i32
  }
  func.func @transform_3(%arg0: i32) -> (i32, i32) {
    %c0_i32 = arith.constant 0 : i32
    %c0_i32_0 = arith.constant 0 : i32
    %c0_i32_1 = arith.constant 0 : i32
    return %c0_i32, %c0_i32_0 : i32, i32
  }
  func.func @transform_4(%arg0: i32) -> (i32, i32) {
    %c0_i32 = arith.constant 0 : i32
    %c0_i32_0 = arith.constant 0 : i32
    %c0_i32_1 = arith.constant 0 : i32
    return %c0_i32, %c0_i32_0 : i32, i32
  }
  func.func @transform_5(%arg0: i32) -> (i32, i32) {
    %c0_i32 = arith.constant 0 : i32
    %c0_i32_0 = arith.constant 0 : i32
    %c0_i32_1 = arith.constant 0 : i32
    return %c0_i32, %c0_i32_0 : i32, i32
  }
  func.func @transform_6(%arg0: i32) -> (i32, i32) {
    %c0_i32 = arith.constant 0 : i32
    %c0_i32_0 = arith.constant 0 : i32
    %c0_i32_1 = arith.constant 0 : i32
    return %c0_i32, %c0_i32_0 : i32, i32
  }
  func.func @transform_7(%arg0: i32) -> (i32, i32) {
    %c0_i32 = arith.constant 0 : i32
    %c0_i32_0 = arith.constant 0 : i32
    return %arg0, %c0_i32 : i32, i32
  }
}

</mosaic_0001>

<llo_original>
// kernel: server_model_forward.1
$region0: #{server_model_forward.1}
  #allocation0 [shape = 'u32[]', space=smem, size = 0x4, offset = 0x4, fixed_abs, tag = 'smem constant byte address 0x4 - core index']
  #allocation1 [shape = 'u32[144,128]{1,0:T(1,128)}', space=vmem, size = 0x12000, scoped, tag = 'internal scratch']
  %s0 = inlined_call_operand.vmem [shape: bf16[16,256], index: 0, kind: input, shape index: {}]
  %s1 = inlined_call_operand.vmem [shape: bf16[256,128], index: 1, kind: input, shape index: {}]
  %s2 = inlined_call_operand.vmem [shape: f32[1,128], index: 2, kind: input, shape index: {}]
  %s3 = inlined_call_operand.vmem [shape: bf16[128,128], index: 3, kind: input, shape index: {}]
  %s4 = inlined_call_operand.vmem [shape: f32[1,128], index: 4, kind: input, shape index: {}]
  %s5 = inlined_call_operand.hbm [shape: bf16[128,128], index: 5, kind: input, shape index: {}]
  %s6 = inlined_call_operand.vmem [shape: f32[1,128], index: 6, kind: input, shape index: {}]
  %s7 = inlined_call_operand.vmem [shape: f32[16,128], index: 7, kind: output, shape index: {}]
  %s8 = sld [smem:[#allocation0]]
  $region42: #{server_model_forward.1} parent=0
    _
  %s10 = ssub.s32 1, %s8
  %s11 = scalar_select 0, %s10, %s8
  $region1: #{server_model_forward.1} parent=0
    #allocation2 [shape = 'u8[32768]{0}', space=vmem, size = 0x8000, scoped, tag = 'input window, operand 5, single buffered']
    #allocation3 [shape = 's32[1]{0}', space=sflag, size = 0x4, scoped, tag = 'scoped memory for server_model_forward.1']
    %12 = vsyncpa [#allocation3], 0
    // Predicated region
    $region2: #{server_model_forward.1} parent=1 // pred_check
      _
    $region3: #{server_model_forward.1} parent=1 // pred_check_branch
      %14 = sbr.rel (0) target = $region5
    $region4: #{server_model_forward.1} parent=1 // pred_region
      _
    $region5: #{server_model_forward.1} parent=1 // pred_fallthru
      _
    // Predicated region
    $region6: #{server_model_forward.1} parent=1 // pred_check
      _
    $region7: #{server_model_forward.1} parent=1 // pred_check_branch
      %16 = sbr.rel (0) target = $region9
    $region8: #{server_model_forward.1} parent=1 // pred_region
      _
    $region9: #{server_model_forward.1} parent=1 // pred_fallthru
      _
    // Predicated region
    $region10: #{server_model_forward.1} parent=1 // pred_check
      _
    $region11: #{server_model_forward.1} parent=1 // pred_check_branch
      %18 = sbr.rel (0) target = $region13
    $region12: #{server_model_forward.1} parent=1 // pred_region
      _
    $region13: #{server_model_forward.1} parent=1 // pred_fallthru
      _
    // Predicated region
    $region14: #{server_model_forward.1} parent=1 // pred_check
      _
    $region15: #{server_model_forward.1} parent=1 // pred_check_branch
      %20 = sbr.rel (0) target = $region17
    $region16: #{server_model_forward.1} parent=1 // pred_region
      _
    $region17: #{server_model_forward.1} parent=1 // pred_fallthru
      _
    // Predicated region
    $region18: #{server_model_forward.1} parent=1 // pred_check
      _
    $region19: #{server_model_forward.1} parent=1 // pred_check_branch
      %22 = sbr.rel (0) target = $region21
    $region20: #{server_model_forward.1} parent=1 // pred_region
      _
    $region21: #{server_model_forward.1} parent=1 // pred_fallthru
      _
    // Predicated region
    $region22: #{server_model_forward.1} parent=1 // pred_check
      _
    $region23: #{server_model_forward.1} parent=1 // pred_check_branch
      %24 = sbr.rel (0) target = $region25
    $region24: #{server_model_forward.1} parent=1 // pred_region
      %s26 = ssub.s32 1024, 1024
      %27 = vsyncadd [#allocation3], %s26
      %s28 = sshll.u32 [#allocation2], 4
      %s29 = int_to_ptr.vmem [resolvable:$true] %s28
      %34 = dma.hbm_to_vmem [thread:$0]  %s5, 1024, %s29, [#allocation3], 64, 64, 4
    $region25: #{server_model_forward.1} parent=1 // pred_fallthru
      _
    // Predicated region
    $region26: #{server_model_forward.1} parent=1 // pred_check
      _
    $region27: #{server_model_forward.1} parent=1 // pred_check_branch
      %36 = sbr.rel (0) target = $region29
    $region28: #{server_model_forward.1} parent=1 // pred_region
      _
    $region29: #{server_model_forward.1} parent=1 // pred_fallthru
      _
    // Predicated region
    $region30: #{server_model_forward.1} parent=1 // pred_check
      _
    $region31: #{server_model_forward.1} parent=1 // pred_check_branch
      %38 = sbr.rel (0) target = $region33
    $region32: #{server_model_forward.1} parent=1 // pred_region
      %39 = dma.done [#allocation3], 1024
    $region33: #{server_model_forward.1} parent=1 // pred_fallthru
      _
    %v41 = vld [vmem:[%s0] sm:$0xff]
    %v42 = vld [vmem:[%s0 + $0x8] sm:$0xff]
    %v43 = vld [vmem:[%s1] sm:$0xf]
    %v44 = vld [vmem:[%s1 + $0x4] sm:$0xf]
    %v45 = vld [vmem:[%s1 + $0x8] sm:$0xf]
    %v46 = vld [vmem:[%s1 + $0xc] sm:$0xf]
    %v47 = vld [vmem:[%s1 + $0x10] sm:$0xf]
    %v48 = vld [vmem:[%s1 + $0x14] sm:$0xf]
    %v49 = vld [vmem:[%s1 + $0x18] sm:$0xf]
    %v50 = vld [vmem:[%s1 + $0x1c] sm:$0xf]
    %v51 = vld [vmem:[%s1 + $0x20] sm:$0xf]
    %v52 = vld [vmem:[%s1 + $0x24] sm:$0xf]
    %v53 = vld [vmem:[%s1 + $0x28] sm:$0xf]
    %v54 = vld [vmem:[%s1 + $0x2c] sm:$0xf]
    %v55 = vld [vmem:[%s1 + $0x30] sm:$0xf]
    %v56 = vld [vmem:[%s1 + $0x34] sm:$0xf]
    %v57 = vld [vmem:[%s1 + $0x38] sm:$0xf]
    %v58 = vld [vmem:[%s1 + $0x3c] sm:$0xf]
    %v59 = vld [vmem:[%s1 + $0x40] sm:$0xf]
    %v60 = vld [vmem:[%s1 + $0x44] sm:$0xf]
    %v61 = vld [vmem:[%s1 + $0x48] sm:$0xf]
    %v62 = vld [vmem:[%s1 + $0x4c] sm:$0xf]
    %v63 = vld [vmem:[%s1 + $0x50] sm:$0xf]
    %v64 = vld [vmem:[%s1 + $0x54] sm:$0xf]
    %v65 = vld [vmem:[%s1 + $0x58] sm:$0xf]
    %v66 = vld [vmem:[%s1 + $0x5c] sm:$0xf]
    %v67 = vld [vmem:[%s1 + $0x60] sm:$0xf]
    %v68 = vld [vmem:[%s1 + $0x64] sm:$0xf]
    %v69 = vld [vmem:[%s1 + $0x68] sm:$0xf]
    %v70 = vld [vmem:[%s1 + $0x6c] sm:$0xf]
    %v71 = vld [vmem:[%s1 + $0x70] sm:$0xf]
    %v72 = vld [vmem:[%s1 + $0x74] sm:$0xf]
    %v73 = vld [vmem:[%s1 + $0x78] sm:$0xf]
    %v74 = vld [vmem:[%s1 + $0x7c] sm:$0xf]
    %v75 = vld [vmem:[%s2] sm:$0x1]
    %v77 = vlaneseq
    %v78 = vshrl.u32 %v77, 7
    %v79 = vsub.s32 0, %v78
    %v80 = vrot.slane %v75, %v79
    %v84 = vunpack.c.l.b16 %v41
    %v85 = vunpack.c.h.b16 %v41
    %v86 = vunpack.c.l.b16 %v42
    %v87 = vunpack.c.h.b16 %v42
    %v88 = vpack.c.b16 %v86, %v84
    %v89 = vpack.c.b16 %v87, %v85
    %v124 = vunpack.c.l.b16 %v43
    %v125 = vunpack.c.l.b16 %v44
    %v126 = vunpack.c.l.b16 %v45
    %v127 = vunpack.c.l.b16 %v46
    %v128 = vunpack.c.l.b16 %v47
    %v129 = vunpack.c.l.b16 %v48
    %v130 = vunpack.c.l.b16 %v49
    %v131 = vunpack.c.l.b16 %v50
    %v132 = vunpack.c.l.b16 %v51
    %v133 = vunpack.c.l.b16 %v52
    %v134 = vunpack.c.l.b16 %v53
    %v135 = vunpack.c.l.b16 %v54
    %v136 = vunpack.c.l.b16 %v55
    %v137 = vunpack.c.l.b16 %v56
    %v138 = vunpack.c.l.b16 %v57
    %v139 = vunpack.c.l.b16 %v58
    %v140 = vunpack.c.l.b16 %v59
    %v141 = vunpack.c.l.b16 %v60
    %v142 = vunpack.c.l.b16 %v61
    %v143 = vunpack.c.l.b16 %v62
    %v144 = vunpack.c.l.b16 %v63
    %v145 = vunpack.c.l.b16 %v64
    %v146 = vunpack.c.l.b16 %v65
    %v147 = vunpack.c.l.b16 %v66
    %v148 = vunpack.c.l.b16 %v67
    %v149 = vunpack.c.l.b16 %v68
    %v150 = vunpack.c.l.b16 %v69
    %v151 = vunpack.c.l.b16 %v70
    %v152 = vunpack.c.l.b16 %v71
    %v153 = vunpack.c.l.b16 %v72
    %v154 = vunpack.c.l.b16 %v73
    %v155 = vunpack.c.l.b16 %v74
    %v156 = vpack.c.b16 %v125, %v124
    %v157 = vpack.c.b16 %v127, %v126
    %v158 = vpack.c.b16 %v129, %v128
    %v159 = vpack.c.b16 %v131, %v130
    %v160 = vpack.c.b16 %v133, %v132
    %v161 = vpack.c.b16 %v135, %v134
    %v162 = vpack.c.b16 %v137, %v136
    %v163 = vpack.c.b16 %v139, %v138
    %v164 = vpack.c.b16 %v141, %v140
    %v165 = vpack.c.b16 %v143, %v142
    %v166 = vpack.c.b16 %v145, %v144
    %v167 = vpack.c.b16 %v147, %v146
    %v168 = vpack.c.b16 %v149, %v148
    %v169 = vpack.c.b16 %v151, %v150
    %v170 = vpack.c.b16 %v153, %v152
    %v171 = vpack.c.b16 %v155, %v154
    %188 = vmatprep.subr.bf16.mxu0 0
    %189 = vmatpush1.bf16.msra.mxu0 %v156
    %190 = vmatprep.subr.bf16.mxu0 0
    %191 = vmatpush1.bf16.msra.mxu0 %v157
    %192 = vmatprep.subr.bf16.mxu0 0
    %193 = vmatpush1.bf16.msra.mxu0 %v158
    %194 = vmatprep.subr.bf16.mxu0 0
    %195 = vmatpush1.bf16.msra.mxu0 %v159
    %196 = vmatprep.subr.bf16.mxu0 0
    %197 = vmatpush1.bf16.msra.mxu0 %v160
    %198 = vmatprep.subr.bf16.mxu0 0
    %199 = vmatpush1.bf16.msra.mxu0 %v161
    %200 = vmatprep.subr.bf16.mxu0 0
    %201 = vmatpush1.bf16.msra.mxu0 %v162
    %202 = vmatprep.subr.bf16.mxu0 0
    %203 = vmatpush1.bf16.msra.mxu0 %v163
    %204 = vmatprep.subr.bf16.mxu0 0
    %205 = vmatpush1.bf16.msra.mxu0 %v164
    %206 = vmatprep.subr.bf16.mxu0 0
    %207 = vmatpush1.bf16.msra.mxu0 %v165
    %208 = vmatprep.subr.bf16.mxu0 0
    %209 = vmatpush1.bf16.msra.mxu0 %v166
    %210 = vmatprep.subr.bf16.mxu0 0
    %211 = vmatpush1.bf16.msra.mxu0 %v167
    %212 = vmatprep.subr.bf16.mxu0 0
    %213 = vmatpush1.bf16.msra.mxu0 %v168
    %214 = vmatprep.subr.bf16.mxu0 0
    %215 = vmatpush1.bf16.msra.mxu0 %v169
    %216 = vmatprep.subr.bf16.mxu0 0
    %217 = vmatpush1.bf16.msra.mxu0 %v170
    %218 = vmatprep.subr.bf16.mxu0 0
    %219 = vmatpush1.bf16.msra.mxu0 %v171
    %220 = vmatprep.mubr.bf16.mxu0 %v89
    %221 = vmatmul.mubr.bf16.gmra.mrb[0].mxu0 %v88
    %v222 = vpop.f32.mrb[0].mxu0
    %v223 = vadd.f32 %v80, %v222
    %v224 = vpop.f32.mrb[0].mxu0
    %v225 = vpop.f32.mrb[0].mxu0
    %v226 = vadd.f32 %v80, %v225
    %v227 = vpop.f32.mrb[0].mxu0
    %228 = vdwg.mxu0
    %v229 = vmax.f32 %v223, 0.0
    %v230 = vmax.f32 %v226, 0.0
    %v231 = vpack.c.bf16 %v230, %v229
    %v232 = vld [vmem:[%s3] sm:$0xf]
    %v233 = vld [vmem:[%s3 + $0x4] sm:$0xf]
    %v234 = vld [vmem:[%s3 + $0x8] sm:$0xf]
    %v235 = vld [vmem:[%s3 + $0xc] sm:$0xf]
    %v236 = vld [vmem:[%s3 + $0x10] sm:$0xf]
    %v237 = vld [vmem:[%s3 + $0x14] sm:$0xf]
    %v238 = vld [vmem:[%s3 + $0x18] sm:$0xf]
    %v239 = vld [vmem:[%s3 + $0x1c] sm:$0xf]
    %v240 = vld [vmem:[%s3 + $0x20] sm:$0xf]
    %v241 = vld [vmem:[%s3 + $0x24] sm:$0xf]
    %v242 = vld [vmem:[%s3 + $0x28] sm:$0xf]
    %v243 = vld [vmem:[%s3 + $0x2c] sm:$0xf]
    %v244 = vld [vmem:[%s3 + $0x30] sm:$0xf]
    %v245 = vld [vmem:[%s3 + $0x34] sm:$0xf]
    %v246 = vld [vmem:[%s3 + $0x38] sm:$0xf]
    %v247 = vld [vmem:[%s3 + $0x3c] sm:$0xf]
    %v248 = vld [vmem:[%s4] sm:$0x1]
    %v250 = vlaneseq
    %v251 = vshrl.u32 %v250, 7
    %v252 = vsub.s32 0, %v251
    %v253 = vrot.slane %v248, %v252
    %v271 = vunpack.c.l.b16 %v232
    %v272 = vunpack.c.l.b16 %v233
    %v273 = vunpack.c.l.b16 %v234
    %v274 = vunpack.c.l.b16 %v235
    %v275 = vunpack.c.l.b16 %v236
    %v276 = vunpack.c.l.b16 %v237
    %v277 = vunpack.c.l.b16 %v238
    %v278 = vunpack.c.l.b16 %v239
    %v279 = vunpack.c.l.b16 %v240
    %v280 = vunpack.c.l.b16 %v241
    %v281 = vunpack.c.l.b16 %v242
    %v282 = vunpack.c.l.b16 %v243
    %v283 = vunpack.c.l.b16 %v244
    %v284 = vunpack.c.l.b16 %v245
    %v285 = vunpack.c.l.b16 %v246
    %v286 = vunpack.c.l.b16 %v247
    %v287 = vpack.c.b16 %v272, %v271
    %v288 = vpack.c.b16 %v274, %v273
    %v289 = vpack.c.b16 %v276, %v275
    %v290 = vpack.c.b16 %v278, %v277
    %v291 = vpack.c.b16 %v280, %v279
    %v292 = vpack.c.b16 %v282, %v281
    %v293 = vpack.c.b16 %v284, %v283
    %v294 = vpack.c.b16 %v286, %v285
    %303 = vmatprep.subr.bf16.mxu0 0
    %304 = vmatpush1.bf16.msra.mxu0 %v287
    %305 = vmatprep.subr.bf16.mxu0 0
    %306 = vmatpush1.bf16.msra.mxu0 %v288
    %307 = vmatprep.subr.bf16.mxu0 0
    %308 = vmatpush1.bf16.msra.mxu0 %v289
    %309 = vmatprep.subr.bf16.mxu0 0
    %310 = vmatpush1.bf16.msra.mxu0 %v290
    %311 = vmatprep.subr.bf16.mxu0 0
    %312 = vmatpush1.bf16.msra.mxu0 %v291
    %313 = vmatprep.subr.bf16.mxu0 0
    %314 = vmatpush1.bf16.msra.mxu0 %v292
    %315 = vmatprep.subr.bf16.mxu0 0
    %316 = vmatpush1.bf16.msra.mxu0 %v293
    %317 = vmatprep.subr.bf16.mxu0 0
    %318 = vmatpush1.bf16.msra.mxu0 %v294
    %319 = vmatprep.subr.bf16.mxu0 0
    %320 = vmatpush1.bf16.msra.mxu0 0
    %321 = vmatprep.subr.bf16.mxu0 0
    %322 = vmatpush1.bf16.msra.mxu0 0
    %323 = vmatprep.subr.bf16.mxu0 0
    %324 = vmatpush1.bf16.msra.mxu0 0
    %325 = vmatprep.subr.bf16.mxu0 0
    %326 = vmatpush1.bf16.msra.mxu0 0
    %327 = vmatprep.subr.bf16.mxu0 0
    %328 = vmatpush1.bf16.msra.mxu0 0
    %329 = vmatprep.subr.bf16.mxu0 0
    %330 = vmatpush1.bf16.msra.mxu0 0
    %331 = vmatprep.subr.bf16.mxu0 0
    %332 = vmatpush1.bf16.msra.mxu0 0
    %333 = vmatprep.subr.bf16.mxu0 0
    %334 = vmatpush1.bf16.msra.mxu0 0
    %335 = vmatprep.mubr.bf16.mxu0 0
    %336 = vmatmul.mubr.bf16.gmra.mrb[0].mxu0 %v231
    %v337 = vpop.f32.mrb[0].mxu0
    %v338 = vadd.f32 %v253, %v337
    %v339 = vpop.f32.mrb[0].mxu0
    %v340 = vpop.f32.mrb[0].mxu0
    %v341 = vadd.f32 %v253, %v340
    %v342 = vpop.f32.mrb[0].mxu0
    %343 = vdwg.mxu0
    %v344 = vmax.f32 %v338, 0.0
    %v345 = vmax.f32 %v341, 0.0
    %v346 = vpack.c.bf16 %v345, %v344
    %v347 = vld [vmem:[#allocation2] sm:$0xf]
    %v348 = vld [vmem:[#allocation2 + $0x4] sm:$0xf]
    %v349 = vld [vmem:[#allocation2 + $0x8] sm:$0xf]
    %v350 = vld [vmem:[#allocation2 + $0xc] sm:$0xf]
    %v351 = vld [vmem:[#allocation2 + $0x10] sm:$0xf]
    %v352 = vld [vmem:[#allocation2 + $0x14] sm:$0xf]
    %v353 = vld [vmem:[#allocation2 + $0x18] sm:$0xf]
    %v354 = vld [vmem:[#allocation2 + $0x1c] sm:$0xf]
    %v355 = vld [vmem:[#allocation2 + $0x20] sm:$0xf]
    %v356 = vld [vmem:[#allocation2 + $0x24] sm:$0xf]
    %v357 = vld [vmem:[#allocation2 + $0x28] sm:$0xf]
    %v358 = vld [vmem:[#allocation2 + $0x2c] sm:$0xf]
    %v359 = vld [vmem:[#allocation2 + $0x30] sm:$0xf]
    %v360 = vld [vmem:[#allocation2 + $0x34] sm:$0xf]
    %v361 = vld [vmem:[#allocation2 + $0x38] sm:$0xf]
    %v362 = vld [vmem:[#allocation2 + $0x3c] sm:$0xf]
    %v363 = vld [vmem:[%s6] sm:$0x1]
    %v365 = vlaneseq
    %v366 = vshrl.u32 %v365, 7
    %v367 = vsub.s32 0, %v366
    %v368 = vrot.slane %v363, %v367
    %v386 = vunpack.c.l.b16 %v347
    %v387 = vunpack.c.l.b16 %v348
    %v388 = vunpack.c.l.b16 %v349
    %v389 = vunpack.c.l.b16 %v350
    %v390 = vunpack.c.l.b16 %v351
    %v391 = vunpack.c.l.b16 %v352
    %v392 = vunpack.c.l.b16 %v353
    %v393 = vunpack.c.l.b16 %v354
    %v394 = vunpack.c.l.b16 %v355
    %v395 = vunpack.c.l.b16 %v356
    %v396 = vunpack.c.l.b16 %v357
    %v397 = vunpack.c.l.b16 %v358
    %v398 = vunpack.c.l.b16 %v359
    %v399 = vunpack.c.l.b16 %v360
    %v400 = vunpack.c.l.b16 %v361
    %v401 = vunpack.c.l.b16 %v362
    %v402 = vpack.c.b16 %v387, %v386
    %v403 = vpack.c.b16 %v389, %v388
    %v404 = vpack.c.b16 %v391, %v390
    %v405 = vpack.c.b16 %v393, %v392
    %v406 = vpack.c.b16 %v395, %v394
    %v407 = vpack.c.b16 %v397, %v396
    %v408 = vpack.c.b16 %v399, %v398
    %v409 = vpack.c.b16 %v401, %v400
    %418 = vmatprep.subr.bf16.mxu0 0
    %419 = vmatpush1.bf16.msra.mxu0 %v402
    %420 = vmatprep.subr.bf16.mxu0 0
    %421 = vmatpush1.bf16.msra.mxu0 %v403
    %422 = vmatprep.subr.bf16.mxu0 0
    %423 = vmatpush1.bf16.msra.mxu0 %v404
    %424 = vmatprep.subr.bf16.mxu0 0
    %425 = vmatpush1.bf16.msra.mxu0 %v405
    %426 = vmatprep.subr.bf16.mxu0 0
    %427 = vmatpush1.bf16.msra.mxu0 %v406
    %428 = vmatprep.subr.bf16.mxu0 0
    %429 = vmatpush1.bf16.msra.mxu0 %v407
    %430 = vmatprep.subr.bf16.mxu0 0
    %431 = vmatpush1.bf16.msra.mxu0 %v408
    %432 = vmatprep.subr.bf16.mxu0 0
    %433 = vmatpush1.bf16.msra.mxu0 %v409
    %434 = vmatprep.subr.bf16.mxu0 0
    %435 = vmatpush1.bf16.msra.mxu0 0
    %436 = vmatprep.subr.bf16.mxu0 0
    %437 = vmatpush1.bf16.msra.mxu0 0
    %438 = vmatprep.subr.bf16.mxu0 0
    %439 = vmatpush1.bf16.msra.mxu0 0
    %440 = vmatprep.subr.bf16.mxu0 0
    %441 = vmatpush1.bf16.msra.mxu0 0
    %442 = vmatprep.subr.bf16.mxu0 0
    %443 = vmatpush1.bf16.msra.mxu0 0
    %444 = vmatprep.subr.bf16.mxu0 0
    %445 = vmatpush1.bf16.msra.mxu0 0
    %446 = vmatprep.subr.bf16.mxu0 0
    %447 = vmatpush1.bf16.msra.mxu0 0
    %448 = vmatprep.subr.bf16.mxu0 0
    %449 = vmatpush1.bf16.msra.mxu0 0
    %450 = vmatprep.mubr.bf16.mxu0 0
    %451 = vmatmul.mubr.bf16.gmra.mrb[0].mxu0 %v346
    %v452 = vpop.f32.mrb[0].mxu0
    %v453 = vadd.f32 %v368, %v452
    %v454 = vpop.f32.mrb[0].mxu0
    %v455 = vpop.f32.mrb[0].mxu0
    %v456 = vadd.f32 %v368, %v455
    %v457 = vpop.f32.mrb[0].mxu0
    %458 = vdwg.mxu0
    %459 = vst [vmem:[%s7] sm:$0xff] %v453
    %460 = vst [vmem:[%s7 + $0x8] sm:$0xff] %v456
    // Predicated region
    $region34: #{server_model_forward.1} parent=1 // pred_check
      _
    $region35: #{server_model_forward.1} parent=1 // pred_check_branch
      %462 = sbr.rel (0) target = $region37
    $region36: #{server_model_forward.1} parent=1 // pred_region
      _
    $region37: #{server_model_forward.1} parent=1 // pred_fallthru
      _
    // Predicated region
    $region38: #{server_model_forward.1} parent=1 // pred_check
      _
    $region39: #{server_model_forward.1} parent=1 // pred_check_branch
      %464 = sbr.rel (0) target = $region41
    $region40: #{server_model_forward.1} parent=1 // pred_region
      _
    $region41: #{server_model_forward.1} parent=1 // pred_fallthru
      _
    %465 = vsyncpa [#allocation3], 1

</llo_original>
